<compile_context>
chip_gen: v7x
topology: tpu7x:2x2x1
jax: 0.10.0
libtpu: 0.0.40
codegen_flags: <defaults>
</compile_context>

<pallas_src>
import functools

import jax
import jax.numpy as jnp
from jax import lax
from jax.experimental import pallas as pl
from jax.experimental.pallas import tpu as pltpu


# --------------------------- K / V projection kernel ---------------------------

def _kv_proj_kernel(x_ref, wk_ref, wv_ref, k_ref, v_ref):
    """One (batch, seq-tile) grid step: K = x @ Wk, V = x @ Wv."""
    x = x_ref[0]                                           # (tile, C)
    k_ref[0] = jnp.dot(x, wk_ref[...],
                       preferred_element_type=jnp.float32).astype(k_ref.dtype)
    v_ref[0] = jnp.dot(x, wv_ref[...],
                       preferred_element_type=jnp.float32).astype(v_ref.dtype)


def _project_kv(x, wk, wv, *, t_tile, vmem_limit_bytes):
    """Project K and V once per call: (B,T,C) @ (C,H) -> two (B,T,H) tensors."""
    B, T, C = x.shape
    H = wk.shape[1]
    n_t = T // t_tile
    bytes_el = jnp.dtype(x.dtype).itemsize
    cost = pl.CostEstimate(
        flops=int(4 * B * T * C * H),
        transcendentals=0,
        bytes_accessed=int(B * T * C * bytes_el
                           + 2 * C * H * bytes_el
                           + 2 * B * T * H * bytes_el),
    )
    return pl.pallas_call(
        _kv_proj_kernel,
        out_shape=(jax.ShapeDtypeStruct((B, T, H), x.dtype),
                   jax.ShapeDtypeStruct((B, T, H), x.dtype)),
        grid_spec=pltpu.PrefetchScalarGridSpec(
            num_scalar_prefetch=0,
            grid=(B, n_t),
            in_specs=[
                pl.BlockSpec((1, t_tile, C), lambda b, i: (b, i, 0)),  # x rows
                pl.BlockSpec((C, H), lambda b, i: (0, 0)),             # Wk (resident)
                pl.BlockSpec((C, H), lambda b, i: (0, 0)),             # Wv (resident)
            ],
            out_specs=(pl.BlockSpec((1, t_tile, H), lambda b, i: (b, i, 0)),
                       pl.BlockSpec((1, t_tile, H), lambda b, i: (b, i, 0))),
        ),
        compiler_params=pltpu.CompilerParams(
            dimension_semantics=("parallel", "parallel"),
            vmem_limit_bytes=vmem_limit_bytes,
        ),
        cost_estimate=cost,
    )(x, wk, wv)


# ------------------------------- Flash attention --------------------------------

def _flash_head_kernel(xq_ref, k_ref, v_ref, wq_ref, o_ref,
                       q_scr, m_scr, l_scr, acc_scr, *, approx_recip):
    """One (batch, q-tile, kv-tile) grid step: hoisted q proj + online softmax."""
    ki = pl.program_id(2)

    @pl.when(ki == 0)
    def _init():
        # q projection hoisted out of the kv loop (done once per (b, q-tile)).
        # The softmax scale was folded into wq on the host.
        q_scr[...] = jnp.dot(xq_ref[0], wq_ref[...],
                             preferred_element_type=jnp.float32).astype(q_scr.dtype)
        m_scr[...] = jnp.full_like(m_scr, -jnp.inf)
        l_scr[...] = jnp.zeros_like(l_scr)
        acc_scr[...] = jnp.zeros_like(acc_scr)

    q = q_scr[...]                                          # (tq, H) compute dtype
    k = k_ref[0]                                            # (tk, H)
    v = v_ref[0]                                            # (tk, H)

    # Scores: contract last axes directly -> no transposed copy of k.
    s = lax.dot_general(q, k, dimension_numbers=(((1,), (1,)), ((), ())),
                        preferred_element_type=jnp.float32)  # (tq, tk) f32

    # Online softmax update (statistics in f32).
    m_prev = m_scr[...]                                      # (tq, 1)
    m_new = jnp.maximum(m_prev, jnp.max(s, axis=-1, keepdims=True))
    alpha = jnp.exp(m_prev - m_new)
    p = jnp.exp(s - m_new)                                   # (tq, tk) f32
    l_scr[...] = alpha * l_scr[...] + jnp.sum(p, axis=-1, keepdims=True)
    acc_scr[...] = alpha * acc_scr[...] + jnp.dot(
        p.astype(v.dtype), v, preferred_element_type=jnp.float32)
    m_scr[...] = m_new

    # dropout(p=0.0) is the identity -> elided.

    @pl.when(ki == pl.num_programs(2) - 1)
    def _finalize():
        inv_l = pl.reciprocal(l_scr[...], approx=approx_recip)
        o_ref[0] = (acc_scr[...] * inv_l).astype(o_ref.dtype)


def _choose_tile(T, target, min_step):
    """Largest divisor of T <= target, preferring 128-aligned tiles (unmasked
    MXU pushes / vst), falling back to multiples of min_step (16 bf16 / 8 f32)."""
    if T <= target:
        return T
    t = (target // 128) * 128
    while t >= 128:
        if T % t == 0:
            return t
        t -= 128
    t = (target // min_step) * min_step
    while t >= min_step:
        if T % t == 0:
            return t
        t -= min_step
    return T


def head_forward(x, w_key, w_query, w_value, *,
                 q_tile=256, kv_tile=512, compute_dtype=jnp.bfloat16,
                 vmem_limit_bytes=48 * 1024 * 1024):
    """Single-head attention: softmax((xWq)(xWk)^T * C**-0.5) @ (xWv).

    x: (B, T, C); w_*: (C, H). Returns (B, T, H) in x.dtype.
    """
    B, T, C = x.shape
    H = w_key.shape[1]
    out_dtype = x.dtype
    scale = float(C) ** -0.5   # matches the PyTorch code: C ** -0.5 with C = n_embd

    min_step = 16 if compute_dtype == jnp.bfloat16 else 8
    tq = _choose_tile(T, q_tile, min_step)
    tk = _choose_tile(T, kv_tile, min_step)
    n_q = T // tq
    n_kv = T // tk

    # bf16 operands feed the MXU at full rate and halve VMEM/HBM traffic;
    # all statistics / accumulation stay in f32 inside the kernels.
    xc = x.astype(compute_dtype)
    wk = w_key.astype(compute_dtype)
    wv = w_value.astype(compute_dtype)
    # Fold the softmax scale into wq on the host (one (C,H) multiply per call).
    wq = (w_query.astype(jnp.float32) * scale).astype(compute_dtype)

    # K / V projected once per call (not once per q-tile); streamed as (1,tk,H).
    k_full, v_full = _project_kv(xc, wk, wv, t_tile=tk,
                                 vmem_limit_bytes=vmem_limit_bytes)

    kernel = functools.partial(
        _flash_head_kernel,
        approx_recip=(compute_dtype != jnp.float32),
    )

    bytes_c = jnp.dtype(compute_dtype).itemsize
    cost = pl.CostEstimate(
        # q projection once + scores + p@v (K/V projection accounted in _project_kv).
        flops=int(B * (2 * T * C * H + 4 * T * T * H)),
        transcendentals=int(B * T * T),
        bytes_accessed=int(
            B * T * C * bytes_c                      # x (resident across kv axis)
            + 2 * B * T * H * bytes_c * n_q          # K, V streamed per q-tile
            + C * H * bytes_c                        # wq (resident, counted once)
            + B * T * H * jnp.dtype(out_dtype).itemsize),   # output
    )

    return pl.pallas_call(
        kernel,
        out_shape=jax.ShapeDtypeStruct((B, T, H), out_dtype),
        grid_spec=pltpu.PrefetchScalarGridSpec(
            num_scalar_prefetch=0,
            grid=(B, n_q, n_kv),
            in_specs=[
                pl.BlockSpec((1, tq, C), lambda b, qi, ki: (b, qi, 0)),  # x -> q rows
                pl.BlockSpec((1, tk, H), lambda b, qi, ki: (b, ki, 0)),  # K tile
                pl.BlockSpec((1, tk, H), lambda b, qi, ki: (b, ki, 0)),  # V tile
                pl.BlockSpec((C, H), lambda b, qi, ki: (0, 0)),          # wq (scaled)
            ],
            out_specs=pl.BlockSpec((1, tq, H), lambda b, qi, ki: (b, qi, 0)),
            scratch_shapes=[
                pltpu.VMEM((tq, H), compute_dtype),  # q: hoisted projection
                pltpu.VMEM((tq, 1), jnp.float32),    # m: running row max
                pltpu.VMEM((tq, 1), jnp.float32),    # l: running denominator
                pltpu.VMEM((tq, H), jnp.float32),    # acc: unnormalized output
            ],
        ),
        compiler_params=pltpu.CompilerParams(
            dimension_semantics=("parallel", "parallel", "arbitrary"),
            vmem_limit_bytes=vmem_limit_bytes,
        ),
        cost_estimate=cost,
    )(xc, k_full, v_full, wq)


def head_forward_ref(x, w_key, w_query, w_value):
    """Pure-JAX reference mirroring the PyTorch forward (f32)."""
    B, T, C = x.shape
    k = x @ w_key
    q = x @ w_query
    v = x @ w_value
    wei = (q @ jnp.swapaxes(k, -2, -1)) * (C ** -0.5)
    wei = jax.nn.softmax(wei, axis=-1)
    return wei @ v


if __name__ == "__main__":
    root = jax.random.PRNGKey(0)
    k1, k2 = jax.random.split(root)

    # ---- Test 1: module-scale toy shape (B=2, T=8, C=32, H=16), f32 compute ----
    B, T, C, H = 2, 8, 32, 16
    kx, kk, kq, kv = jax.random.split(k1, 4)
    x = jax.random.normal(kx, (B, T, C), dtype=jnp.float32)
    # nn.Linear(n_embd, head_size) weight is (H, C); store the transpose (C, H)
    # so the kernel computes x @ W, matching x @ weight.T in torch.
    w_key = (jax.random.normal(kk, (H, C), dtype=jnp.float32) * (C ** -0.5)).T
    w_query = (jax.random.normal(kq, (H, C), dtype=jnp.float32) * (C ** -0.5)).T
    w_value = (jax.random.normal(kv, (H, C), dtype=jnp.float32) * (C ** -0.5)).T

    out = jax.block_until_ready(
        head_forward(x, w_key, w_query, w_value, compute_dtype=jnp.float32))
    ref = head_forward_ref(x, w_key, w_query, w_value)
    assert out.shape == (B, T, H), out.shape
    assert jnp.allclose(out, ref, atol=1e-5, rtol=1e-5), \
        float(jnp.max(jnp.abs(out - ref)))

    # ---- Test 2: lane-dense multi-tile flash path, bf16 MXU operands ----
    B2, T2, C2, H2 = 2, 256, 128, 128
    kx2, kk2, kq2, kv2 = jax.random.split(k2, 4)
    x2 = jax.random.normal(kx2, (B2, T2, C2), dtype=jnp.float32)
    w_key2 = (jax.random.normal(kk2, (H2, C2), dtype=jnp.float32) * (C2 ** -0.5)).T
    w_query2 = (jax.random.normal(kq2, (H2, C2), dtype=jnp.float32) * (C2 ** -0.5)).T
    w_value2 = (jax.random.normal(kv2, (H2, C2), dtype=jnp.float32) * (C2 ** -0.5)).T

    out2 = jax.block_until_ready(
        head_forward(x2, w_key2, w_query2, w_value2,
                     q_tile=128, kv_tile=128, compute_dtype=jnp.bfloat16))
    ref2 = head_forward_ref(x2, w_key2, w_query2, w_value2)
    assert out2.shape == (B2, T2, H2), out2.shape
    assert jnp.allclose(out2, ref2, atol=5e-2, rtol=5e-2), \
        float(jnp.max(jnp.abs(out2 - ref2)))

    print("KERNEL_OK")
</pallas_src>

<mosaic_0001>
module attributes {stable_mosaic.version = 11 : i64} {
  func.func @_kv_proj_kernel(%arg0: i32, %arg1: i32, %arg2: memref<1x8x32xf32, #tpu.memory_space<vmem>>, %arg3: memref<32x16xf32, #tpu.memory_space<vmem>>, %arg4: memref<32x16xf32, #tpu.memory_space<vmem>>, %arg5: memref<1x8x16xf32, #tpu.memory_space<vmem>>, %arg6: memref<1x8x16xf32, #tpu.memory_space<vmem>>) attributes {dimension_semantics = [#tpu.dimension_semantics<parallel>, #tpu.dimension_semantics<parallel>], iteration_bounds = array<i64: 2, 1>, scalar_prefetch = 0 : i64, scratch_operands = 0 : i64, tpu.core_type = #tpu.core_type<tc>, window_params = [{transform_indices = @transform_0, window_bounds = array<i64: 1, 8, 32>}, {pipeline_mode = #tpu.pipeline_mode<synchronous>, transform_indices = @transform_1, window_bounds = array<i64: 32, 16>}, {pipeline_mode = #tpu.pipeline_mode<synchronous>, transform_indices = @transform_2, window_bounds = array<i64: 32, 16>}, {transform_indices = @transform_3, window_bounds = array<i64: 1, 8, 16>}, {transform_indices = @transform_4, window_bounds = array<i64: 1, 8, 16>}]} {
    %c0 = arith.constant 0 : index
    %c0_0 = arith.constant 0 : index
    %c0_1 = arith.constant 0 : index
    %0 = vector.load %arg2[%c0, %c0_0, %c0_1] : memref<1x8x32xf32, #tpu.memory_space<vmem>>, vector<1x8x32xf32>
    %1 = vector.shape_cast %0 : vector<1x8x32xf32> to vector<8x32xf32>
    %c0_2 = arith.constant 0 : index
    %c0_3 = arith.constant 0 : index
    %2 = vector.load %arg3[%c0_2, %c0_3] : memref<32x16xf32, #tpu.memory_space<vmem>>, vector<32x16xf32>
    %cst = arith.constant dense<0.000000e+00> : vector<8x16xf32>
    %3 = tpu.matmul %1, %2, %cst {dimension_numbers = #tpu.dot_dimension_numbers<[1], [0], [0], [1], [0, 0, 1, 1], [], []>} : vector<8x32xf32>, vector<32x16xf32>, vector<8x16xf32> -> vector<8x16xf32>
    %c0_4 = arith.constant 0 : index
    %c0_5 = arith.constant 0 : index
    %c0_6 = arith.constant 0 : index
    %4 = vector.load %arg5[%c0_4, %c0_5, %c0_6] : memref<1x8x16xf32, #tpu.memory_space<vmem>>, vector<1x8x16xf32>
    %5 = vector.shape_cast %4 : vector<1x8x16xf32> to vector<8x16xf32>
    %6 = vector.shape_cast %3 : vector<8x16xf32> to vector<1x8x16xf32>
    tpu.vector_store %arg5[%c0_4, %c0_5, %c0_6], %6 {strides = array<i32>} : memref<1x8x16xf32, #tpu.memory_space<vmem>>, vector<1x8x16xf32>,
    %c0_7 = arith.constant 0 : index
    %c0_8 = arith.constant 0 : index
    %7 = vector.load %arg4[%c0_7, %c0_8] : memref<32x16xf32, #tpu.memory_space<vmem>>, vector<32x16xf32>
    %cst_9 = arith.constant dense<0.000000e+00> : vector<8x16xf32>
    %8 = tpu.matmul %1, %7, %cst_9 {dimension_numbers = #tpu.dot_dimension_numbers<[1], [0], [0], [1], [0, 0, 1, 1], [], []>} : vector<8x32xf32>, vector<32x16xf32>, vector<8x16xf32> -> vector<8x16xf32>
    %c0_10 = arith.constant 0 : index
    %c0_11 = arith.constant 0 : index
    %c0_12 = arith.constant 0 : index
    %9 = vector.load %arg6[%c0_10, %c0_11, %c0_12] : memref<1x8x16xf32, #tpu.memory_space<vmem>>, vector<1x8x16xf32>
    %10 = vector.shape_cast %9 : vector<1x8x16xf32> to vector<8x16xf32>
    %11 = vector.shape_cast %8 : vector<8x16xf32> to vector<1x8x16xf32>
    tpu.vector_store %arg6[%c0_10, %c0_11, %c0_12], %11 {strides = array<i32>} : memref<1x8x16xf32, #tpu.memory_space<vmem>>, vector<1x8x16xf32>,
    return
  }
  func.func @transform_0(%arg0: i32, %arg1: i32) -> (i32, i32, i32) {
    %c0_i32 = arith.constant 0 : i32
    %c0_i32_0 = arith.constant 0 : i32
    return %arg0, %arg1, %c0_i32 : i32, i32, i32
  }
  func.func @transform_1(%arg0: i32, %arg1: i32) -> (i32, i32) {
    %c0_i32 = arith.constant 0 : i32
    %c0_i32_0 = arith.constant 0 : i32
    %c0_i32_1 = arith.constant 0 : i32
    return %c0_i32, %c0_i32_0 : i32, i32
  }
  func.func @transform_2(%arg0: i32, %arg1: i32) -> (i32, i32) {
    %c0_i32 = arith.constant 0 : i32
    %c0_i32_0 = arith.constant 0 : i32
    %c0_i32_1 = arith.constant 0 : i32
    return %c0_i32, %c0_i32_0 : i32, i32
  }
  func.func @transform_3(%arg0: i32, %arg1: i32) -> (i32, i32, i32) {
    %c0_i32 = arith.constant 0 : i32
    %c0_i32_0 = arith.constant 0 : i32
    return %arg0, %arg1, %c0_i32 : i32, i32, i32
  }
  func.func @transform_4(%arg0: i32, %arg1: i32) -> (i32, i32, i32) {
    %c0_i32 = arith.constant 0 : i32
    %c0_i32_0 = arith.constant 0 : i32
    return %arg0, %arg1, %c0_i32 : i32, i32, i32
  }
}

</mosaic_0001>

<llo_original>
// kernel: tpu_custom_call.1
$region0: #{tpu_custom_call.1}
  #allocation0 [shape = 'u32[]', space=smem, size = 0x4, offset = 0x4, fixed_abs, tag = 'smem constant byte address 0x4 - core index']
  #allocation1 [shape = 'u32[144,128]{1,0:T(1,128)}', space=vmem, size = 0x12000, scoped, tag = 'internal scratch']
  %s0 = inlined_call_operand.vmem [shape: f32[2,8,32], index: 0, kind: input, shape index: {}]
  %s1 = inlined_call_operand.vmem [shape: f32[32,16], index: 1, kind: input, shape index: {}]
  %s2 = inlined_call_operand.vmem [shape: f32[32,16], index: 2, kind: input, shape index: {}]
  %s3 = inlined_call_operand.hbm [shape: f32[2,8,16], index: 3, kind: output, shape index: {0}]
  %s4 = inlined_call_operand.hbm [shape: f32[2,8,16], index: 4, kind: output, shape index: {1}]
  %5 = xla_tuple %s3, %s4
  %s6 = sld [smem:[#allocation0]]
  $region53: #{tpu_custom_call.1} parent=0
    _
  %s8 = ssub.s32 1, %s6
  %s9 = scalar_select 0, %s8, %s6
  $region1: #{tpu_custom_call.1} parent=0
    #allocation2 [shape = 'u8[8192]{0}', space=vmem, size = 0x2000, scoped, tag = 'output window, operand 0']
    #allocation3 [shape = 's32[2]{0}', space=sflag, size = 0x8, scoped, tag = 'scoped memory for tpu_custom_call.1']
    #allocation4 [shape = 'u8[8192]{0}', space=vmem, size = 0x2000, scoped, tag = 'output window, operand 1']
    #allocation5 [shape = 's32[2]{0}', space=sflag, size = 0x8, scoped, tag = 'scoped memory for tpu_custom_call.1']
    %10 = vsyncpa [#allocation3], 0
    %s11 = scalar_lea.sflag [#allocation3], 1
    %12 = vsyncpa %s11, 0
    %13 = vsyncpa [#allocation5], 0
    %s14 = scalar_lea.sflag [#allocation5], 1
    %15 = vsyncpa %s14, 0
    loop: start=0, step=1, limit=4
    $region2: #{tpu_custom_call.1} parent=1 // loop_pre_header
      _
    $region3: #{tpu_custom_call.1} parent=1 // loop_header
      %s17 = sphi 0, %s21
      %p18 = scmp.ge.s32.totalorder %s17, 4
      %s24 = sphi 0, %s36
      %s25 = sphi 0, %s32
      %s26 = sphi 0, %s24
      %s27 = sphi 0, %s25
      %s28 = sphi 0, %s26
      %s29 = sphi 0, %s27
      %s41 = sphi 0, %s43
      %s44 = sphi 0, %s41
      %s45 = sphi 0, %s44
      %s61 = sphi 0, %s45
      %s65 = sphi 0, %s65
      %s67 = sphi 0, %s65
      %s68 = sphi 0, %s67
      %s82 = sphi 0, %s68
      %s86 = sphi 0, %s86
      %s88 = sphi 0, %s86
      %s89 = sphi 0, %s88
      %s103 = sphi 0, %s89
      %s111 = sphi 0, %s113
      %s114 = sphi 0, %s111
      %s115 = sphi 0, %s114
      %s131 = sphi 0, %s115
      %s139 = sphi 0, %s141
      %s142 = sphi 0, %s139
      %s143 = sphi 0, %s142
      %s159 = sphi 0, %s143
    $region4: #{tpu_custom_call.1} parent=1 // loop_header_branch
      %20 = sbr.rel (%p18) target = $region8
    $region5: #{tpu_custom_call.1} parent=1 // loop_body
      %s22 = ssub.s32 %s17, 1
      %s23 = ssub.s32 %s17, 2
      %s30 = sadd.s32 1, %s25
      %p31 = scmp.ge.s32.totalorder %s30, 1
      %s32 = scalar_select %p31, 0, %s30
      %s33 = sadd.s32 1, %s24
      %s34 = scalar_select %p31, %s33, %s24
      %p35 = scmp.ge.s32.totalorder %s34, 2
      %s36 = scalar_select %p35, 0, %s34
      %s37 = ssub.s32 %s24, %s36
      %s38 = ssub.s32 %s25, %s32
      %s39 = sor.u32 %s37, %s38
      %p40 = scmp.eq.s32.totalorder %s39, 0
      %s42 = sadd.s32 %s41, 1
      %s43 = scalar_select %p40, %s41, %s42
      %p46 = pneg %p40
      %p47 = scmp.eq.s32.totalorder %s17, 1
      %p48 = por %p46, %p47
      %p49 = scmp.ne.s32.totalorder %s41, %s44
      %p50 = scmp.eq.s32.totalorder %s17, 0
      %p51 = por %p49, %p50
      %p52 = scmp.ne.s32.totalorder %s41, %s44
      %p53 = scmp.eq.s32.totalorder %s22, 1
      %p54 = por %p52, %p53
      %p55 = scmp.ne.s32.totalorder %s44, %s45
      %p56 = scmp.eq.s32.totalorder %s22, 0
      %p57 = por %p55, %p56
      %p58 = scmp.ne.s32.totalorder %s44, %s45
      %p59 = scmp.eq.s32.totalorder %s23, 1
      %p60 = por %p58, %p59
      %p62 = scmp.ne.s32.totalorder %s45, %s61
      %p63 = scmp.eq.s32.totalorder %s23, 0
      %p64 = por %p62, %p63
      %s66 = sadd.s32 %s65, 1
      %p69 = scmp.eq.s32.totalorder %s17, 1
      %p70 = scmp.ne.s32.totalorder %s65, %s67
      %p71 = scmp.eq.s32.totalorder %s17, 0
      %p72 = por %p70, %p71
      %p73 = scmp.ne.s32.totalorder %s65, %s67
      %p74 = scmp.eq.s32.totalorder %s22, 1
      %p75 = por %p73, %p74
      %p76 = scmp.ne.s32.totalorder %s67, %s68
      %p77 = scmp.eq.s32.totalorder %s22, 0
      %p78 = por %p76, %p77
      %p79 = scmp.ne.s32.totalorder %s67, %s68
      %p80 = scmp.eq.s32.totalorder %s23, 1
      %p81 = por %p79, %p80
      %p83 = scmp.ne.s32.totalorder %s68, %s82
      %p84 = scmp.eq.s32.totalorder %s23, 0
      %p85 = por %p83, %p84
      %s87 = sadd.s32 %s86, 1
      %p90 = scmp.eq.s32.totalorder %s17, 1
      %p91 = scmp.ne.s32.totalorder %s86, %s88
      %p92 = scmp.eq.s32.totalorder %s17, 0
      %p93 = por %p91, %p92
      %p94 = scmp.ne.s32.totalorder %s86, %s88
      %p95 = scmp.eq.s32.totalorder %s22, 1
      %p96 = por %p94, %p95
      %p97 = scmp.ne.s32.totalorder %s88, %s89
      %p98 = scmp.eq.s32.totalorder %s22, 0
      %p99 = por %p97, %p98
      %p100 = scmp.ne.s32.totalorder %s88, %s89
      %p101 = scmp.eq.s32.totalorder %s23, 1
      %p102 = por %p100, %p101
      %p104 = scmp.ne.s32.totalorder %s89, %s103
      %p105 = scmp.eq.s32.totalorder %s23, 0
      %p106 = por %p104, %p105
      %s107 = ssub.s32 %s24, %s36
      %s108 = ssub.s32 %s25, %s32
      %s109 = sor.u32 %s107, %s108
      %p110 = scmp.eq.s32.totalorder %s109, 0
      %s112 = sadd.s32 %s111, 1
      %s113 = scalar_select %p110, %s111, %s112
      %p116 = pneg %p110
      %p117 = scmp.eq.s32.totalorder %s17, 1
      %p118 = por %p116, %p117
      %p119 = scmp.ne.s32.totalorder %s111, %s114
      %p120 = scmp.eq.s32.totalorder %s17, 0
      %p121 = por %p119, %p120
      %p122 = scmp.ne.s32.totalorder %s111, %s114
      %p123 = scmp.eq.s32.totalorder %s22, 1
      %p124 = por %p122, %p123
      %p125 = scmp.ne.s32.totalorder %s114, %s115
      %p126 = scmp.eq.s32.totalorder %s22, 0
      %p127 = por %p125, %p126
      %p128 = scmp.ne.s32.totalorder %s114, %s115
      %p129 = scmp.eq.s32.totalorder %s23, 1
      %p130 = por %p128, %p129
      %p132 = scmp.ne.s32.totalorder %s115, %s131
      %p133 = scmp.eq.s32.totalorder %s23, 0
      %p134 = por %p132, %p133
      %s135 = ssub.s32 %s24, %s36
      %s136 = ssub.s32 %s25, %s32
      %s137 = sor.u32 %s135, %s136
      %p138 = scmp.eq.s32.totalorder %s137, 0
      %s140 = sadd.s32 %s139, 1
      %s141 = scalar_select %p138, %s139, %s140
      %p144 = pneg %p138
      %p145 = scmp.eq.s32.totalorder %s17, 1
      %p146 = por %p144, %p145
      %p147 = scmp.ne.s32.totalorder %s139, %s142
      %p148 = scmp.eq.s32.totalorder %s17, 0
      %p149 = por %p147, %p148
      %p150 = scmp.ne.s32.totalorder %s139, %s142
      %p151 = scmp.eq.s32.totalorder %s22, 1
      %p152 = por %p150, %p151
      %p153 = scmp.ne.s32.totalorder %s142, %s143
      %p154 = scmp.eq.s32.totalorder %s22, 0
      %p155 = por %p153, %p154
      %p156 = scmp.ne.s32.totalorder %s142, %s143
      %p157 = scmp.eq.s32.totalorder %s23, 1
      %p158 = por %p156, %p157
      %p160 = scmp.ne.s32.totalorder %s143, %s159
      %p161 = scmp.eq.s32.totalorder %s23, 0
      %p162 = por %p160, %p161
      %p163 = scmp.le.s32.totalorder 1, %s17
      %p164 = scmp.lt.s32.totalorder %s17, 3
      %p165 = pnand %p163, %p164
      %p166 = pneg %p165
      // Predicated region
      $region9: #{tpu_custom_call.1} parent=5 // pred_check
        _
      $region10: #{tpu_custom_call.1} parent=5 // pred_check_branch
        %168 = sbr.rel (%p165) target = $region12
      $region11: #{tpu_custom_call.1} parent=5 // pred_region
        %s169 = ssub.s32 %s17, 1
        // Predicated region
        $region13: #{tpu_custom_call.1} parent=11 // pred_check
          %p170 = pneg %p78
        $region14: #{tpu_custom_call.1} parent=11 // pred_check_branch
          %172 = sbr.rel (%p170) target = $region16
        $region15: #{tpu_custom_call.1} parent=11 // pred_region
          _
        $region16: #{tpu_custom_call.1} parent=11 // pred_fallthru
          _
        // Predicated region
        $region17: #{tpu_custom_call.1} parent=11 // pred_check
          %p173 = pneg %p99
        $region18: #{tpu_custom_call.1} parent=11 // pred_check_branch
          %175 = sbr.rel (%p173) target = $region20
        $region19: #{tpu_custom_call.1} parent=11 // pred_region
          _
        $region20: #{tpu_custom_call.1} parent=11 // pred_fallthru
          _
      $region12: #{tpu_custom_call.1} parent=5 // pred_fallthru
        _
      %p176 = scmp.lt.s32.totalorder %s17, 2
      // Predicated region
      $region21: #{tpu_custom_call.1} parent=5 // pred_check
        %p177 = pneg %p176
      $region22: #{tpu_custom_call.1} parent=5 // pred_check_branch
        %179 = sbr.rel (%p177) target = $region24
      $region23: #{tpu_custom_call.1} parent=5 // pred_region
        // Predicated region
        $region25: #{tpu_custom_call.1} parent=23 // pred_check
          %p180 = pneg %p51
        $region26: #{tpu_custom_call.1} parent=23 // pred_check_branch
          %182 = sbr.rel (%p180) target = $region28
        $region27: #{tpu_custom_call.1} parent=23 // pred_region
          %p183 = scmp.lt.s32.totalorder %s24, 1
          %s184 = scalar_select %p183, %s24, 1
          %p185 = scmp.lt.s32.totalorder %s25, 0
          %s186 = scalar_select %p185, %s25, 0
          %s187 = sadd.s32 %s186, %s184
          %s188 = smul.addr %s187, 8
          %s189 = scalar_lea.vmem %s0, %s188
        $region28: #{tpu_custom_call.1} parent=23 // pred_fallthru
          _
      $region24: #{tpu_custom_call.1} parent=5 // pred_fallthru
        _
      %p190 = scmp.le.s32.totalorder 1, %s17
      %p191 = scmp.lt.s32.totalorder %s17, 3
      %p192 = pnand %p190, %p191
      %p193 = pneg %p192
      // Predicated region
      $region29: #{tpu_custom_call.1} parent=5 // pred_check
        _
      $region30: #{tpu_custom_call.1} parent=5 // pred_check_branch
        %195 = sbr.rel (%p192) target = $region32
      $region31: #{tpu_custom_call.1} parent=5 // pred_region
        %s196 = ssub.s32 %s17, 1
        %p197 = scmp.lt.s32.totalorder %s26, 1
        %s198 = scalar_select %p197, %s26, 1
        %p199 = scmp.lt.s32.totalorder %s27, 0
        %s200 = scalar_select %p199, %s27, 0
        %s201 = sadd.s32 %s200, %s198
        %s202 = smul.addr %s201, 8
        %s203 = scalar_lea.vmem %s0, %s202
        %p204 = pneg %p57
        %p205 = pneg %p54
        %p206 = pneg %p78
        %p207 = pneg %p75
        %p208 = pneg %p99
        %p209 = pneg %p96
        %p210 = pneg %p127
        %p211 = pneg %p124
        %s212 = sand.u32 %s114, 1
        %s213 = scalar_lea.sflag [#allocation3], %s212
        %s214 = sand.u32 %s114, 1
        %s215 = smul.addr %s214, 8
        %s216 = scalar_lea.vmem [#allocation2], %s215
        %p217 = pneg %p155
        %p218 = pneg %p152
        %s219 = sand.u32 %s142, 1
        %s220 = scalar_lea.sflag [#allocation5], %s219
        %s221 = sand.u32 %s142, 1
        %s222 = smul.addr %s221, 8
        %s223 = scalar_lea.vmem [#allocation4], %s222
        %p224 = scmp.lt.s32.totalorder %s26, 1
        %s225 = scalar_select %p224, %s26, 1
        %p226 = scmp.lt.s32.totalorder %s27, 0
        %s227 = scalar_select %p226, %s27, 0
        %s228 = sadd.s32 %s227, %s225
        %s229 = smul.addr %s228, 8
        %s230 = scalar_lea.vmem %s0, %s229
        %v231 = vld [vmem:[%s230] sm:$0xff]
        %v232 = vld [vmem:[%s1] sm:$0xff]
        %v233 = vld [vmem:[%s1 + $0x8] sm:$0xff]
        %v234 = vld [vmem:[%s1 + $0x10] sm:$0xff]
        %v235 = vld [vmem:[%s1 + $0x18] sm:$0xff]
        %vm236 = vcmask 261120
        %v238 = vsel %vm236, %v231, 0
        %240 = vmatprep.subr.mxu0 0.0
        %241 = vmatpush1.msra.mxu0 %v232
        %242 = vmatprep.subr.mxu0 0.0
        %243 = vmatpush1.msra.mxu0 %v233
        %244 = vmatprep.subr.mxu0 0.0
        %245 = vmatpush1.msra.mxu0 %v234
        %246 = vmatprep.subr.mxu0 0.0
        %247 = vmatpush1.msra.mxu0 %v235
        %248 = vmatprep.subr.mxu0 0.0
        %249 = vmatpush1.msra.mxu0 0.0
        %250 = vmatprep.subr.mxu0 0.0
        %251 = vmatpush1.msra.mxu0 0.0
        %252 = vmatprep.subr.mxu0 0.0
        %253 = vmatpush1.msra.mxu0 0.0
        %254 = vmatprep.subr.mxu0 0.0
        %255 = vmatpush1.msra.mxu0 0.0
        %256 = vmatprep.subr.mxu0 0.0
        %257 = vmatpush1.msra.mxu0 0.0
        %258 = vmatprep.subr.mxu0 0.0
        %259 = vmatpush1.msra.mxu0 0.0
        %260 = vmatprep.subr.mxu0 0.0
        %261 = vmatpush1.msra.mxu0 0.0
        %262 = vmatprep.subr.mxu0 0.0
        %263 = vmatpush1.msra.mxu0 0.0
        %264 = vmatprep.subr.mxu0 0.0
        %265 = vmatpush1.msra.mxu0 0.0
        %266 = vmatprep.subr.mxu0 0.0
        %267 = vmatpush1.msra.mxu0 0.0
        %268 = vmatprep.subr.mxu0 0.0
        %269 = vmatpush1.msra.mxu0 0.0
        %270 = vmatprep.subr.mxu0 0.0
        %271 = vmatpush1.msra.mxu0 0.0
        %272 = vmatprep.subr.mxu0 0.0
        %273 = vmatpush1.msra.mxu0 0.0
        %274 = vmatprep.subr.mxu0 0.0
        %275 = vmatpush1.msra.mxu0 0.0
        %276 = vmatprep.subr.mxu0 0.0
        %277 = vmatpush1.msra.mxu0 0.0
        %278 = vmatprep.subr.mxu0 0.0
        %279 = vmatpush1.msra.mxu0 0.0
        %280 = vmatprep.subr.mxu0 0.0
        %281 = vmatpush1.msra.mxu0 0.0
        %282 = vmatprep.subr.mxu0 0.0
        %283 = vmatpush1.msra.mxu0 0.0
        %284 = vmatprep.subr.mxu0 0.0
        %285 = vmatpush1.msra.mxu0 0.0
        %286 = vmatprep.subr.mxu0 0.0
        %287 = vmatpush1.msra.mxu0 0.0
        %288 = vmatprep.subr.mxu0 0.0
        %289 = vmatpush1.msra.mxu0 0.0
        %290 = vmatprep.subr.mxu0 0.0
        %291 = vmatpush1.msra.mxu0 0.0
        %292 = vmatprep.subr.mxu0 0.0
        %293 = vmatpush1.msra.mxu0 0.0
        %294 = vmatprep.subr.mxu0 0.0
        %295 = vmatpush1.msra.mxu0 0.0
        %296 = vmatprep.subr.mxu0 0.0
        %297 = vmatpush1.msra.mxu0 0.0
        %298 = vmatprep.subr.mxu0 0.0
        %299 = vmatpush1.msra.mxu0 0.0
        %300 = vmatprep.subr.mxu0 0.0
        %301 = vmatpush1.msra.mxu0 0.0
        %302 = vmatprep.subr.mxu0 0.0
        %303 = vmatpush1.msra.mxu0 0.0
        %304 = vmatprep.mubr.f32.mxu0 0.0
        %305 = vmatmul.mubr.f32.gmra.mrb[0].mxu0 %v238
        %v306 = vpop.f32.mrb[0].mxu0
        %v307 = vadd.f32 0.0, %v306
        %v308 = vpop.f32.mrb[0].mxu0
        %309 = vdwg.mxu0
        %vm310 = vcmask 130048
        %311 = vst.msk [vmem:[%s216] sm:$0xff] %vm310, %v307
        %v312 = vld [vmem:[%s2] sm:$0xff]
        %v313 = vld [vmem:[%s2 + $0x8] sm:$0xff]
        %v314 = vld [vmem:[%s2 + $0x10] sm:$0xff]
        %v315 = vld [vmem:[%s2 + $0x18] sm:$0xff]
        %316 = vmatprep.subr.mxu0 0.0
        %317 = vmatpush1.msra.mxu0 %v312
        %318 = vmatprep.subr.mxu0 0.0
        %319 = vmatpush1.msra.mxu0 %v313
        %320 = vmatprep.subr.mxu0 0.0
        %321 = vmatpush1.msra.mxu0 %v314
        %322 = vmatprep.subr.mxu0 0.0
        %323 = vmatpush1.msra.mxu0 %v315
        %324 = vmatprep.subr.mxu0 0.0
        %325 = vmatpush1.msra.mxu0 0.0
        %326 = vmatprep.subr.mxu0 0.0
        %327 = vmatpush1.msra.mxu0 0.0
        %328 = vmatprep.subr.mxu0 0.0
        %329 = vmatpush1.msra.mxu0 0.0
        %330 = vmatprep.subr.mxu0 0.0
        %331 = vmatpush1.msra.mxu0 0.0
        %332 = vmatprep.subr.mxu0 0.0
        %333 = vmatpush1.msra.mxu0 0.0
        %334 = vmatprep.subr.mxu0 0.0
        %335 = vmatpush1.msra.mxu0 0.0
        %336 = vmatprep.subr.mxu0 0.0
        %337 = vmatpush1.msra.mxu0 0.0
        %338 = vmatprep.subr.mxu0 0.0
        %339 = vmatpush1.msra.mxu0 0.0
        %340 = vmatprep.subr.mxu0 0.0
        %341 = vmatpush1.msra.mxu0 0.0
        %342 = vmatprep.subr.mxu0 0.0
        %343 = vmatpush1.msra.mxu0 0.0
        %344 = vmatprep.subr.mxu0 0.0
        %345 = vmatpush1.msra.mxu0 0.0
        %346 = vmatprep.subr.mxu0 0.0
        %347 = vmatpush1.msra.mxu0 0.0
        %348 = vmatprep.subr.mxu0 0.0
        %349 = vmatpush1.msra.mxu0 0.0
        %350 = vmatprep.subr.mxu0 0.0
        %351 = vmatpush1.msra.mxu0 0.0
        %352 = vmatprep.subr.mxu0 0.0
        %353 = vmatpush1.msra.mxu0 0.0
        %354 = vmatprep.subr.mxu0 0.0
        %355 = vmatpush1.msra.mxu0 0.0
        %356 = vmatprep.subr.mxu0 0.0
        %357 = vmatpush1.msra.mxu0 0.0
        %358 = vmatprep.subr.mxu0 0.0
        %359 = vmatpush1.msra.mxu0 0.0
        %360 = vmatprep.subr.mxu0 0.0
        %361 = vmatpush1.msra.mxu0 0.0
        %362 = vmatprep.subr.mxu0 0.0
        %363 = vmatpush1.msra.mxu0 0.0
        %364 = vmatprep.subr.mxu0 0.0
        %365 = vmatpush1.msra.mxu0 0.0
        %366 = vmatprep.subr.mxu0 0.0
        %367 = vmatpush1.msra.mxu0 0.0
        %368 = vmatprep.subr.mxu0 0.0
        %369 = vmatpush1.msra.mxu0 0.0
        %370 = vmatprep.subr.mxu0 0.0
        %371 = vmatpush1.msra.mxu0 0.0
        %372 = vmatprep.subr.mxu0 0.0
        %373 = vmatpush1.msra.mxu0 0.0
        %374 = vmatprep.subr.mxu0 0.0
        %375 = vmatpush1.msra.mxu0 0.0
        %376 = vmatprep.subr.mxu0 0.0
        %377 = vmatpush1.msra.mxu0 0.0
        %378 = vmatprep.subr.mxu0 0.0
        %379 = vmatpush1.msra.mxu0 0.0
        %380 = vmatprep.mubr.f32.mxu0 0.0
        %381 = vmatmul.mubr.f32.gmra.mrb[0].mxu0 %v238
        %v382 = vpop.f32.mrb[0].mxu0
        %v383 = vadd.f32 0.0, %v382
        %v384 = vpop.f32.mrb[0].mxu0
        %385 = vdwg.mxu0
        %386 = vst.msk [vmem:[%s223] sm:$0xff] %vm310, %v383
        %s387 = sand.u32 %s114, 1
        %s388 = scalar_lea.sflag [#allocation3], %s387
        %s389 = sand.u32 %s114, 1
        %s390 = smul.addr %s389, 8
        %s391 = scalar_lea.vmem [#allocation2], %s390
        %s392 = sand.u32 %s142, 1
        %s393 = scalar_lea.sflag [#allocation5], %s392
        %s394 = sand.u32 %s142, 1
        %s395 = smul.addr %s394, 8
        %s396 = scalar_lea.vmem [#allocation4], %s395
        // Predicated region
        $region33: #{tpu_custom_call.1} parent=31 // pred_check
          %p397 = pneg %p124
        $region34: #{tpu_custom_call.1} parent=31 // pred_check_branch
          %399 = sbr.rel (%p397) target = $region36
        $region35: #{tpu_custom_call.1} parent=31 // pred_region
          %s401 = ssub.s32 128, 128
          %402 = vsyncadd %s388, %s401
          %s403 = sadd.s32 %s27, %s26
          %s404 = smul.addr %s403, 128
          %s405 = scalar_lea.hbm %s3, %s404
          %s407 = sshll.u32 %s391, 4
          %s408 = int_to_ptr.vmem [resolvable:$true] %s407
          %410 = dma.vmem_to_hbm [thread:$0]  %s408, 128, %s405, %s388
        $region36: #{tpu_custom_call.1} parent=31 // pred_fallthru
          _
        // Predicated region
        $region37: #{tpu_custom_call.1} parent=31 // pred_check
          %p411 = pneg %p152
        $region38: #{tpu_custom_call.1} parent=31 // pred_check_branch
          %413 = sbr.rel (%p411) target = $region40
        $region39: #{tpu_custom_call.1} parent=31 // pred_region
          %s415 = ssub.s32 128, 128
          %416 = vsyncadd %s393, %s415
          %s417 = sadd.s32 %s27, %s26
          %s418 = smul.addr %s417, 128
          %s419 = scalar_lea.hbm %s4, %s418
          %s421 = sshll.u32 %s396, 4
          %s422 = int_to_ptr.vmem [resolvable:$true] %s421
          %424 = dma.vmem_to_hbm [thread:$0]  %s422, 128, %s419, %s393
        $region40: #{tpu_custom_call.1} parent=31 // pred_fallthru
          _
      $region32: #{tpu_custom_call.1} parent=5 // pred_fallthru
        _
      %p425 = scmp.le.s32.totalorder 2, %s17
      // Predicated region
      $region41: #{tpu_custom_call.1} parent=5 // pred_check
        %p426 = pneg %p425
      $region42: #{tpu_custom_call.1} parent=5 // pred_check_branch
        %428 = sbr.rel (%p426) target = $region44
      $region43: #{tpu_custom_call.1} parent=5 // pred_region
        %s429 = ssub.s32 %s17, 2
        // Predicated region
        $region45: #{tpu_custom_call.1} parent=43 // pred_check
          %p430 = pneg %p130
        $region46: #{tpu_custom_call.1} parent=43 // pred_check_branch
          %432 = sbr.rel (%p430) target = $region48
        $region47: #{tpu_custom_call.1} parent=43 // pred_region
          %s433 = sand.u32 %s115, 1
          %s434 = scalar_lea.sflag [#allocation3], %s433
          %s435 = sand.u32 %s115, 1
          %s436 = smul.addr %s435, 8
          %s437 = scalar_lea.vmem [#allocation2], %s436
          %438 = dma.done %s434, 128
        $region48: #{tpu_custom_call.1} parent=43 // pred_fallthru
          _
        // Predicated region
        $region49: #{tpu_custom_call.1} parent=43 // pred_check
          %p439 = pneg %p158
        $region50: #{tpu_custom_call.1} parent=43 // pred_check_branch
          %441 = sbr.rel (%p439) target = $region52
        $region51: #{tpu_custom_call.1} parent=43 // pred_region
          %s442 = sand.u32 %s143, 1
          %s443 = scalar_lea.sflag [#allocation5], %s442
          %s444 = sand.u32 %s143, 1
          %s445 = smul.addr %s444, 8
          %s446 = scalar_lea.vmem [#allocation4], %s445
          %447 = dma.done %s443, 128
        $region52: #{tpu_custom_call.1} parent=43 // pred_fallthru
          _
      $region44: #{tpu_custom_call.1} parent=5 // pred_fallthru
        _
    $region6: #{tpu_custom_call.1} parent=1 // loop_footer
      %s21 = sadd.s32 1, %s17
    $region7: #{tpu_custom_call.1} parent=1 // loop_footer_branch
      %16 = sbr.rel target = $region3
    $region8: #{tpu_custom_call.1} parent=1 // loop_exit
      _
    %448 = vsyncpa [#allocation3], 1
    %s449 = scalar_lea.sflag [#allocation3], 1
    %450 = vsyncpa %s449, 1
    %451 = vsyncpa [#allocation5], 1
    %s452 = scalar_lea.sflag [#allocation5], 1
    %453 = vsyncpa %s452, 1

</llo_original>
